<compile_context>
chip_gen: v5e
topology: v5e:2x2
jax: 0.10.0
libtpu: 0.0.40
codegen_flags: <defaults>
</compile_context>

<pallas_src>
import numpy as np
import jax
import jax.numpy as jnp
from jax.experimental import pallas as pl
from jax.experimental.pallas import tpu as pltpu

FEAT = 1280      # base_model feature dim (EfficientNet-style 1280)
LSTM_H1 = 32     # lstm_layer_1 hidden size
LSTM_H2 = 16     # lstm_layer_2 hidden size
LANES = 128


def _round_up(x, m):
    return (x + m - 1) // m * m


def _gates_to_h(gates, H):
    """PyTorch nn.LSTM gate order (i, f, g, o) with h_prev = c_prev = 0.

    The forget gate multiplies c_prev == 0, so it is dead and skipped.
    sigmoid/tanh are evaluated once on the full 128-lane array, then sliced."""
    sg = jax.nn.sigmoid(gates)
    th = jnp.tanh(gates)
    i = sg[:, 0 * H:1 * H]
    g = th[:, 2 * H:3 * H]
    o = sg[:, 3 * H:4 * H]
    return o * jnp.tanh(i * g)


def _make_kernel(C, HWp, inv_hw, cp):
    # Row layout of the packed parameter array (all block offsets 8-aligned).
    r_wf = 0             # (Cp, 128)  fused  (wb @ wih10), rows C:Cp zero
    r_wih11 = cp         # (32, 128)  lstm1 layer1 (32 -> 32)
    r_wih20 = cp + 32    # (32, 128)  lstm2 layer0 (32 -> 16), lanes 64:128 zero
    r_wih21 = cp + 64    # (16, 128)  lstm2 layer1 (16 -> 16), lanes 64:128 zero
    r_wc = cp + 80       # (16, 128)  final Linear(16, 1), lane 0 real
    r_bias = cp + 96     # (8, 128)   rows: b_fused, b11, b20, b21, bc, 0, 0, 0

    def kernel(x_ref, p_ref, out_ref):
        tb = x_ref.shape[0]
        bias = p_ref[r_bias:r_bias + 8, :]                         # (8, 128)
        wf = p_ref[r_wf:r_wf + cp, :]                              # (Cp, 128)

        # Fused GAP + base Linear + LSTM1/layer0 input projection:
        #   gates1 = (sum_hw(x) / HW) @ (wb @ wih10) + (bb @ wih10 + b10)
        # TODO(synk): the real base_model is an external module passed to
        #             __init__; it is replaced by this GAP + Linear stand-in.
        acc = jnp.zeros((tb, LANES), jnp.float32)
        for c in range(C):                                         # static, small C
            s = jnp.sum(x_ref[:, c * HWp:(c + 1) * HWp],
                        axis=-1, keepdims=True)                    # (tb, 1)
            acc = acc + s * wf[c:c + 1, :]                         # rank-1 update
        g = acc * inv_hw + bias[0:1, :]                            # (tb, 128)
        h = _gates_to_h(g, LSTM_H1)                                # (tb, 32)

        # lstm_layer_1, layer 1: 32 -> 32
        g = jnp.dot(h, p_ref[r_wih11:r_wih11 + LSTM_H1, :],
                    preferred_element_type=jnp.float32) + bias[1:2, :]
        h = _gates_to_h(g, LSTM_H1)

        # lstm_layer_2, layer 0: 32 -> 16 (weights lane-padded; extra lanes zero)
        g = jnp.dot(h, p_ref[r_wih20:r_wih20 + LSTM_H1, :],
                    preferred_element_type=jnp.float32) + bias[2:3, :]
        h = _gates_to_h(g, LSTM_H2)

        # lstm_layer_2, layer 1: 16 -> 16   -> h == h_n[-1]
        g = jnp.dot(h, p_ref[r_wih21:r_wih21 + LSTM_H2, :],
                    preferred_element_type=jnp.float32) + bias[3:4, :]
        h = _gates_to_h(g, LSTM_H2)                                # (tb, 16)

        # final_classifier Linear(16, 1); lane 0 of the padded weight is real.
        y = jnp.dot(h, p_ref[r_wc:r_wc + LSTM_H2, :],
                    preferred_element_type=jnp.float32) + bias[4:5, :]
        out_ref[...] = y[:, 0:1]                                   # (tb, 1)

    return kernel


def _vmem_limit_bytes():
    try:
        cap = int(pltpu.get_tpu_info().vmem_capacity_bytes)
    except Exception:
        cap = 64 * 1024 * 1024                  # conservative (v7x physical size)
    # ~7/8 of physical: ~56 MiB on v7x, up to 100 MiB on v5e/v6e (128 MiB parts).
    return int(min(cap * 7 // 8, 100 * 1024 * 1024))


def _choose_tb(B, row_bytes, small_bytes, vmem_limit):
    """Batch-tile rows: largest multiple of 8 fitting the VMEM budget."""
    per_row = 2 * row_bytes + 24 * LANES * 4    # double-buffered x + intermediates
    budget = vmem_limit - 2 * small_bytes - (4 << 20)
    tb = max(8, budget // per_row // 8 * 8)
    if B >= 16:
        # Keep >= 2 grid programs so v7x can split the batch over its two
        # TensorCores; extra grid steps cost ~0.35 us each on single-TC chips.
        tb = min(tb, _round_up(pl.cdiv(B, 2), 8))
    if tb >= B:
        return B
    return max(8, tb // 8 * 8)


def forward(x, kp, *, tb=None):
    """x: (B, C, H, W) float32 (NCHW). kp: prepare_params output. Returns (B,) f32."""
    B, C, H, W = x.shape
    HW = H * W
    HWp = _round_up(HW, 128)
    Cp = _round_up(C, 8)
    assert kp["packed"].shape == (Cp + 104, LANES), kp["packed"].shape

    x3 = x.reshape(B, C, HW)                    # free dim collapse, stays f32
    if HWp != HW:
        # Zero padding is absorbed by the sum-pool (mean uses 1/HW_real).
        x3 = jnp.pad(x3, ((0, 0), (0, 0), (0, HWp - HW)))
    x2 = x3.reshape(B, C * HWp)                 # dense lane-major layout

    vmem_limit = _vmem_limit_bytes()
    small_bytes = int(kp["packed"].size) * 4
    if tb is None:
        tb = _choose_tb(B, C * HWp * 4, small_bytes, vmem_limit)
    grid = (pl.cdiv(B, tb),)

    kernel = _make_kernel(C, HWp, 1.0 / HW, Cp)
    out = pl.pallas_call(
        kernel,
        out_shape=jax.ShapeDtypeStruct((B, 1), jnp.float32),
        grid=grid,
        in_specs=[
            pl.BlockSpec((tb, C * HWp), lambda b: (b, 0)),          # x tile, pipelined
            pl.BlockSpec((Cp + 104, LANES), lambda b: (0, 0)),      # packed params (resident)
        ],
        out_specs=pl.BlockSpec((tb, 1), lambda b: (b, 0)),          # narrow output
        compiler_params=pltpu.CompilerParams(
            dimension_semantics=("parallel",),
            vmem_limit_bytes=vmem_limit,
        ),
    )(x2, kp["packed"])
    return out[:, 0]                            # final .squeeze(-1)


def init_params(key, C):
    """Logical (PyTorch-style) parameters in f32. W_ih pre-transposed to (in, 4H);
    bias is the combined b_ih + b_hh. W_hh is omitted: it only ever multiplies the
    zero initial hidden state (seq_len == 1)."""
    ks = jax.random.split(key, 12)

    def u(k, shape, scale):
        return jax.random.uniform(k, shape, jnp.float32, -scale, scale)

    s1 = 1.0 / np.sqrt(LSTM_H1)
    s2 = 1.0 / np.sqrt(LSTM_H2)
    sc = 1.0 / np.sqrt(LSTM_H2)

    return dict(
        # base_model stand-in (GAP + Linear(C, 1280))
        wb=jax.random.normal(ks[0], (C, FEAT), jnp.float32) * 0.02,
        bb=jnp.zeros((1, FEAT), jnp.float32),
        # lstm_layer_1
        wih10=u(ks[1], (FEAT, 4 * LSTM_H1), s1),
        b10=u(ks[2], (1, 4 * LSTM_H1), 2 * s1),
        wih11=u(ks[3], (LSTM_H1, 4 * LSTM_H1), s1),
        b11=u(ks[4], (1, 4 * LSTM_H1), 2 * s1),
        # lstm_layer_2
        wih20=u(ks[5], (LSTM_H1, 4 * LSTM_H2), s2),
        b20=u(ks[6], (1, 4 * LSTM_H2), 2 * s2),
        wih21=u(ks[7], (LSTM_H2, 4 * LSTM_H2), s2),
        b21=u(ks[8], (1, 4 * LSTM_H2), 2 * s2),
        # final_classifier Linear(16, 1)
        wc=u(ks[9], (LSTM_H2, 1), sc),
        bc=u(ks[10], (1, 1), sc),
    )


def _pad_lanes(a):
    return jnp.pad(a, ((0, 0), (0, LANES - a.shape[1])))


def prepare_params(p):
    """Fuse the (linear) base-model stand-in into LSTM1/layer0 and pack ALL
    remaining parameters into ONE (Cp+104, 128) f32 array (single tiny DMA)."""
    C = p["wb"].shape[0]
    Cp = _round_up(C, 8)
    hi = jax.lax.Precision.HIGHEST
    w_fused = jnp.dot(p["wb"], p["wih10"], precision=hi)                # (C, 128)
    b_fused = jnp.dot(p["bb"], p["wih10"], precision=hi) + p["b10"]     # (1, 128)
    packed = jnp.concatenate([
        w_fused,                                   # rows       0 : C
        jnp.zeros((Cp - C, LANES), jnp.float32),   #            C : Cp
        p["wih11"],                                # rows      Cp : Cp+32
        _pad_lanes(p["wih20"]),                    # rows   Cp+32 : Cp+64
        _pad_lanes(p["wih21"]),                    # rows   Cp+64 : Cp+80
        _pad_lanes(p["wc"]),                       # rows   Cp+80 : Cp+96
        b_fused,                                   # row    Cp+96
        p["b11"],                                  # row    Cp+97
        _pad_lanes(p["b20"]),                      # row    Cp+98
        _pad_lanes(p["b21"]),                      # row    Cp+99
        _pad_lanes(p["bc"]),                       # row    Cp+100
        jnp.zeros((3, LANES), jnp.float32),        # rows  Cp+101 : Cp+104
    ], axis=0).astype(jnp.float32)
    assert packed.shape == (Cp + 104, LANES), packed.shape
    return dict(packed=packed)


def _reference_forward(x, p):
    """Pure-JAX, unfused f32 reference with the module's chained math."""
    B, C, H, W = x.shape
    hi = jax.lax.Precision.HIGHEST
    pooled = jnp.mean(x.reshape(B, C, H * W), axis=-1)                  # (B, C)
    feat = jnp.dot(pooled, p["wb"], precision=hi) + p["bb"]             # (B, 1280)

    def cell(xin, w_ih, b, Hd):
        g = jnp.dot(xin, w_ih, precision=hi) + b
        i = jax.nn.sigmoid(g[:, :Hd])
        gg = jnp.tanh(g[:, 2 * Hd:3 * Hd])
        o = jax.nn.sigmoid(g[:, 3 * Hd:4 * Hd])
        return o * jnp.tanh(i * gg)

    h = cell(feat, p["wih10"], p["b10"], LSTM_H1)
    h = cell(h, p["wih11"], p["b11"], LSTM_H1)
    h = cell(h, p["wih20"], p["b20"], LSTM_H2)
    h = cell(h, p["wih21"], p["b21"], LSTM_H2)
    return (jnp.dot(h, p["wc"], precision=hi) + p["bc"])[:, 0]


if __name__ == "__main__":
    key = jax.random.PRNGKey(0)
    kx, kp_key = jax.random.split(key)

    B, C, H, W = 2, 4, 16, 16
    x = jax.random.normal(kx, (B, C, H, W), jnp.float32)   # NCHW, like PyTorch
    params = init_params(kp_key, C)
    kernel_params = prepare_params(params)

    y = jax.block_until_ready(forward(x, kernel_params))
    y_ref = jax.block_until_ready(_reference_forward(x, params))

    assert y.shape == (B,), y.shape
    assert np.allclose(np.asarray(y), np.asarray(y_ref), atol=2e-2, rtol=2e-2), (
        np.asarray(y), np.asarray(y_ref))

    print("KERNEL_OK")
</pallas_src>

<mosaic_0001>
module attributes {stable_mosaic.version = 11 : i64} {
  func.func @kernel(%arg0: i32, %arg1: memref<2x1024xf32, #tpu.memory_space<vmem>>, %arg2: memref<112x128xf32, #tpu.memory_space<vmem>>, %arg3: memref<2x1xf32, #tpu.memory_space<vmem>>) attributes {dimension_semantics = [#tpu.dimension_semantics<parallel>], iteration_bounds = array<i64: 1>, scalar_prefetch = 0 : i64, scratch_operands = 0 : i64, tpu.core_type = #tpu.core_type<tc>, window_params = [{transform_indices = @transform_0, window_bounds = array<i64: 2, 1024>}, {pipeline_mode = #tpu.pipeline_mode<synchronous>, transform_indices = @transform_1, window_bounds = array<i64: 112, 128>}, {transform_indices = @transform_2, window_bounds = array<i64: 2, 1>}]} {
    %c104 = arith.constant 104 : index
    %c0 = arith.constant 0 : index
    %0 = vector.load %arg2[%c104, %c0] : memref<112x128xf32, #tpu.memory_space<vmem>>, vector<8x128xf32>
    %c0_0 = arith.constant 0 : index
    %c0_1 = arith.constant 0 : index
    %1 = vector.load %arg2[%c0_0, %c0_1] : memref<112x128xf32, #tpu.memory_space<vmem>>, vector<8x128xf32>
    %cst = arith.constant 0.000000e+00 : f32
    %2 = vector.broadcast %cst : f32 to vector<2x128xf32>
    %c0_2 = arith.constant 0 : index
    %c0_3 = arith.constant 0 : index
    %3 = vector.load %arg1[%c0_2, %c0_3] : memref<2x1024xf32, #tpu.memory_space<vmem>>, vector<2x256xf32>
    %cst_4 = arith.constant dense<0.000000e+00> : vector<2xf32>
    %4 = vector.multi_reduction <add>, %3, %cst_4 [1] : vector<2x256xf32> to vector<2xf32>
    %5 = vector.shape_cast %4 : vector<2xf32> to vector<2x1xf32>
    %6 = vector.extract_strided_slice %1 {offsets = [0, 0], sizes = [1, 128], strides = [1, 1]} : vector<8x128xf32> to vector<1x128xf32>
    %7 = vector.broadcast %5 : vector<2x1xf32> to vector<2x128xf32>
    %8 = vector.broadcast %6 : vector<1x128xf32> to vector<2x128xf32>
    %9 = arith.mulf %7, %8 : vector<2x128xf32>
    %10 = arith.addf %2, %9 : vector<2x128xf32>
    %c0_5 = arith.constant 0 : index
    %c256 = arith.constant 256 : index
    %11 = vector.load %arg1[%c0_5, %c256] : memref<2x1024xf32, #tpu.memory_space<vmem>>, vector<2x256xf32>
    %cst_6 = arith.constant dense<0.000000e+00> : vector<2xf32>
    %12 = vector.multi_reduction <add>, %11, %cst_6 [1] : vector<2x256xf32> to vector<2xf32>
    %13 = vector.shape_cast %12 : vector<2xf32> to vector<2x1xf32>
    %14 = vector.extract_strided_slice %1 {offsets = [1, 0], sizes = [1, 128], strides = [1, 1]} : vector<8x128xf32> to vector<1x128xf32>
    %15 = vector.broadcast %13 : vector<2x1xf32> to vector<2x128xf32>
    %16 = vector.broadcast %14 : vector<1x128xf32> to vector<2x128xf32>
    %17 = arith.mulf %15, %16 : vector<2x128xf32>
    %18 = arith.addf %10, %17 : vector<2x128xf32>
    %c0_7 = arith.constant 0 : index
    %c512 = arith.constant 512 : index
    %19 = vector.load %arg1[%c0_7, %c512] : memref<2x1024xf32, #tpu.memory_space<vmem>>, vector<2x256xf32>
    %cst_8 = arith.constant dense<0.000000e+00> : vector<2xf32>
    %20 = vector.multi_reduction <add>, %19, %cst_8 [1] : vector<2x256xf32> to vector<2xf32>
    %21 = vector.shape_cast %20 : vector<2xf32> to vector<2x1xf32>
    %22 = vector.extract_strided_slice %1 {offsets = [2, 0], sizes = [1, 128], strides = [1, 1]} : vector<8x128xf32> to vector<1x128xf32>
    %23 = vector.broadcast %21 : vector<2x1xf32> to vector<2x128xf32>
    %24 = vector.broadcast %22 : vector<1x128xf32> to vector<2x128xf32>
    %25 = arith.mulf %23, %24 : vector<2x128xf32>
    %26 = arith.addf %18, %25 : vector<2x128xf32>
    %c0_9 = arith.constant 0 : index
    %c768 = arith.constant 768 : index
    %27 = vector.load %arg1[%c0_9, %c768] : memref<2x1024xf32, #tpu.memory_space<vmem>>, vector<2x256xf32>
    %cst_10 = arith.constant dense<0.000000e+00> : vector<2xf32>
    %28 = vector.multi_reduction <add>, %27, %cst_10 [1] : vector<2x256xf32> to vector<2xf32>
    %29 = vector.shape_cast %28 : vector<2xf32> to vector<2x1xf32>
    %30 = vector.extract_strided_slice %1 {offsets = [3, 0], sizes = [1, 128], strides = [1, 1]} : vector<8x128xf32> to vector<1x128xf32>
    %31 = vector.broadcast %29 : vector<2x1xf32> to vector<2x128xf32>
    %32 = vector.broadcast %30 : vector<1x128xf32> to vector<2x128xf32>
    %33 = arith.mulf %31, %32 : vector<2x128xf32>
    %34 = arith.addf %26, %33 : vector<2x128xf32>
    %cst_11 = arith.constant 3.906250e-03 : f32
    %35 = vector.broadcast %cst_11 : f32 to vector<2x128xf32>
    %36 = arith.mulf %34, %35 : vector<2x128xf32>
    %37 = vector.extract_strided_slice %0 {offsets = [0, 0], sizes = [1, 128], strides = [1, 1]} : vector<8x128xf32> to vector<1x128xf32>
    %38 = vector.broadcast %37 : vector<1x128xf32> to vector<2x128xf32>
    %39 = arith.addf %36, %38 : vector<2x128xf32>
    %40 = arith.negf %39 : vector<2x128xf32>
    %41 = math.exp %40 : vector<2x128xf32>
    %cst_12 = arith.constant 1.000000e+00 : f32
    %42 = vector.broadcast %cst_12 : f32 to vector<2x128xf32>
    %43 = arith.addf %42, %41 : vector<2x128xf32>
    %44 = arith.divf %42, %43 : vector<2x128xf32>
    %45 = math.tanh %39 : vector<2x128xf32>
    %46 = vector.extract_strided_slice %44 {offsets = [0, 0], sizes = [2, 32], strides = [1, 1]} : vector<2x128xf32> to vector<2x32xf32>
    %47 = vector.extract_strided_slice %45 {offsets = [0, 64], sizes = [2, 32], strides = [1, 1]} : vector<2x128xf32> to vector<2x32xf32>
    %48 = vector.extract_strided_slice %44 {offsets = [0, 96], sizes = [2, 32], strides = [1, 1]} : vector<2x128xf32> to vector<2x32xf32>
    %49 = arith.mulf %46, %47 : vector<2x32xf32>
    %50 = math.tanh %49 : vector<2x32xf32>
    %51 = arith.mulf %48, %50 : vector<2x32xf32>
    %c8 = arith.constant 8 : index
    %c0_13 = arith.constant 0 : index
    %52 = vector.load %arg2[%c8, %c0_13] : memref<112x128xf32, #tpu.memory_space<vmem>>, vector<32x128xf32>
    %cst_14 = arith.constant dense<0.000000e+00> : vector<2x128xf32>
    %53 = tpu.matmul %51, %52, %cst_14 {dimension_numbers = #tpu.dot_dimension_numbers<[1], [0], [0], [1], [0, 0, 1, 1], [], []>} : vector<2x32xf32>, vector<32x128xf32>, vector<2x128xf32> -> vector<2x128xf32>
    %54 = vector.extract_strided_slice %0 {offsets = [1, 0], sizes = [1, 128], strides = [1, 1]} : vector<8x128xf32> to vector<1x128xf32>
    %55 = vector.broadcast %54 : vector<1x128xf32> to vector<2x128xf32>
    %56 = arith.addf %53, %55 : vector<2x128xf32>
    %57 = arith.negf %56 : vector<2x128xf32>
    %58 = math.exp %57 : vector<2x128xf32>
    %cst_15 = arith.constant 1.000000e+00 : f32
    %59 = vector.broadcast %cst_15 : f32 to vector<2x128xf32>
    %60 = arith.addf %59, %58 : vector<2x128xf32>
    %61 = arith.divf %59, %60 : vector<2x128xf32>
    %62 = math.tanh %56 : vector<2x128xf32>
    %63 = vector.extract_strided_slice %61 {offsets = [0, 0], sizes = [2, 32], strides = [1, 1]} : vector<2x128xf32> to vector<2x32xf32>
    %64 = vector.extract_strided_slice %62 {offsets = [0, 64], sizes = [2, 32], strides = [1, 1]} : vector<2x128xf32> to vector<2x32xf32>
    %65 = vector.extract_strided_slice %61 {offsets = [0, 96], sizes = [2, 32], strides = [1, 1]} : vector<2x128xf32> to vector<2x32xf32>
    %66 = arith.mulf %63, %64 : vector<2x32xf32>
    %67 = math.tanh %66 : vector<2x32xf32>
    %68 = arith.mulf %65, %67 : vector<2x32xf32>
    %c40 = arith.constant 40 : index
    %c0_16 = arith.constant 0 : index
    %69 = vector.load %arg2[%c40, %c0_16] : memref<112x128xf32, #tpu.memory_space<vmem>>, vector<32x128xf32>
    %cst_17 = arith.constant dense<0.000000e+00> : vector<2x128xf32>
    %70 = tpu.matmul %68, %69, %cst_17 {dimension_numbers = #tpu.dot_dimension_numbers<[1], [0], [0], [1], [0, 0, 1, 1], [], []>} : vector<2x32xf32>, vector<32x128xf32>, vector<2x128xf32> -> vector<2x128xf32>
    %71 = vector.extract_strided_slice %0 {offsets = [2, 0], sizes = [1, 128], strides = [1, 1]} : vector<8x128xf32> to vector<1x128xf32>
    %72 = vector.broadcast %71 : vector<1x128xf32> to vector<2x128xf32>
    %73 = arith.addf %70, %72 : vector<2x128xf32>
    %74 = arith.negf %73 : vector<2x128xf32>
    %75 = math.exp %74 : vector<2x128xf32>
    %cst_18 = arith.constant 1.000000e+00 : f32
    %76 = vector.broadcast %cst_18 : f32 to vector<2x128xf32>
    %77 = arith.addf %76, %75 : vector<2x128xf32>
    %78 = arith.divf %76, %77 : vector<2x128xf32>
    %79 = math.tanh %73 : vector<2x128xf32>
    %80 = vector.extract_strided_slice %78 {offsets = [0, 0], sizes = [2, 16], strides = [1, 1]} : vector<2x128xf32> to vector<2x16xf32>
    %81 = vector.extract_strided_slice %79 {offsets = [0, 32], sizes = [2, 16], strides = [1, 1]} : vector<2x128xf32> to vector<2x16xf32>
    %82 = vector.extract_strided_slice %78 {offsets = [0, 48], sizes = [2, 16], strides = [1, 1]} : vector<2x128xf32> to vector<2x16xf32>
    %83 = arith.mulf %80, %81 : vector<2x16xf32>
    %84 = math.tanh %83 : vector<2x16xf32>
    %85 = arith.mulf %82, %84 : vector<2x16xf32>
    %c72 = arith.constant 72 : index
    %c0_19 = arith.constant 0 : index
    %86 = vector.load %arg2[%c72, %c0_19] : memref<112x128xf32, #tpu.memory_space<vmem>>, vector<16x128xf32>
    %cst_20 = arith.constant dense<0.000000e+00> : vector<2x128xf32>
    %87 = tpu.matmul %85, %86, %cst_20 {dimension_numbers = #tpu.dot_dimension_numbers<[1], [0], [0], [1], [0, 0, 1, 1], [], []>} : vector<2x16xf32>, vector<16x128xf32>, vector<2x128xf32> -> vector<2x128xf32>
    %88 = vector.extract_strided_slice %0 {offsets = [3, 0], sizes = [1, 128], strides = [1, 1]} : vector<8x128xf32> to vector<1x128xf32>
    %89 = vector.broadcast %88 : vector<1x128xf32> to vector<2x128xf32>
    %90 = arith.addf %87, %89 : vector<2x128xf32>
    %91 = arith.negf %90 : vector<2x128xf32>
    %92 = math.exp %91 : vector<2x128xf32>
    %cst_21 = arith.constant 1.000000e+00 : f32
    %93 = vector.broadcast %cst_21 : f32 to vector<2x128xf32>
    %94 = arith.addf %93, %92 : vector<2x128xf32>
    %95 = arith.divf %93, %94 : vector<2x128xf32>
    %96 = math.tanh %90 : vector<2x128xf32>
    %97 = vector.extract_strided_slice %95 {offsets = [0, 0], sizes = [2, 16], strides = [1, 1]} : vector<2x128xf32> to vector<2x16xf32>
    %98 = vector.extract_strided_slice %96 {offsets = [0, 32], sizes = [2, 16], strides = [1, 1]} : vector<2x128xf32> to vector<2x16xf32>
    %99 = vector.extract_strided_slice %95 {offsets = [0, 48], sizes = [2, 16], strides = [1, 1]} : vector<2x128xf32> to vector<2x16xf32>
    %100 = arith.mulf %97, %98 : vector<2x16xf32>
    %101 = math.tanh %100 : vector<2x16xf32>
    %102 = arith.mulf %99, %101 : vector<2x16xf32>
    %c88 = arith.constant 88 : index
    %c0_22 = arith.constant 0 : index
    %103 = vector.load %arg2[%c88, %c0_22] : memref<112x128xf32, #tpu.memory_space<vmem>>, vector<16x128xf32>
    %cst_23 = arith.constant dense<0.000000e+00> : vector<2x128xf32>
    %104 = tpu.matmul %102, %103, %cst_23 {dimension_numbers = #tpu.dot_dimension_numbers<[1], [0], [0], [1], [0, 0, 1, 1], [], []>} : vector<2x16xf32>, vector<16x128xf32>, vector<2x128xf32> -> vector<2x128xf32>
    %105 = vector.extract_strided_slice %0 {offsets = [4, 0], sizes = [1, 128], strides = [1, 1]} : vector<8x128xf32> to vector<1x128xf32>
    %106 = vector.broadcast %105 : vector<1x128xf32> to vector<2x128xf32>
    %107 = arith.addf %104, %106 : vector<2x128xf32>
    %108 = vector.extract_strided_slice %107 {offsets = [0, 0], sizes = [2, 1], strides = [1, 1]} : vector<2x128xf32> to vector<2x1xf32>
    %c0_24 = arith.constant 0 : index
    %c0_25 = arith.constant 0 : index
    %109 = vector.load %arg3[%c0_24, %c0_25] : memref<2x1xf32, #tpu.memory_space<vmem>>, vector<2x1xf32>
    tpu.vector_store %arg3[%c0_24, %c0_25], %108 {strides = array<i32>} : memref<2x1xf32, #tpu.memory_space<vmem>>, vector<2x1xf32>,
    return
  }
  func.func @transform_0(%arg0: i32) -> (i32, i32) {
    %c0_i32 = arith.constant 0 : i32
    %c0_i32_0 = arith.constant 0 : i32
    return %arg0, %c0_i32 : i32, i32
  }
  func.func @transform_1(%arg0: i32) -> (i32, i32) {
    %c0_i32 = arith.constant 0 : i32
    %c0_i32_0 = arith.constant 0 : i32
    %c0_i32_1 = arith.constant 0 : i32
    return %c0_i32, %c0_i32_0 : i32, i32
  }
  func.func @transform_2(%arg0: i32) -> (i32, i32) {
    %c0_i32 = arith.constant 0 : i32
    %c0_i32_0 = arith.constant 0 : i32
    return %arg0, %c0_i32 : i32, i32
  }
}

</mosaic_0001>

<llo_original>
// kernel: tpu_custom_call.1
$region0: #{tpu_custom_call.1}
  #allocation0 [shape = 'u32[]', space=smem, size = 0x4, offset = 0x4, fixed_abs, tag = 'smem constant byte address 0x4 - core index']
  #allocation1 [shape = 'u32[72,128]{1,0:T(1,128)}', space=vmem, size = 0x9000, scoped, tag = 'internal scratch']
  %s0 = inlined_call_operand.hbm [shape: f32[2,1024], index: 0, kind: input, shape index: {}]
  %s1 = inlined_call_operand.hbm [shape: f32[112,128], index: 1, kind: input, shape index: {}]
  %s2 = inlined_call_operand.vmem [shape: f32[2,1], index: 2, kind: output, shape index: {}]
  %s3 = sld [smem:[#allocation0]]
  $region26: #{tpu_custom_call.1} parent=0
    _
  %s5 = ssub.s32 1, %s3
  %s6 = scalar_select 0, %s5, %s3
  $region1: #{tpu_custom_call.1} parent=0
    #allocation2 [shape = 'u8[8192]{0}', space=vmem, size = 0x2000, scoped, tag = 'input window, operand 0, single buffered']
    #allocation3 [shape = 's32[1]{0}', space=sflag, size = 0x4, scoped, tag = 'scoped memory for tpu_custom_call.1']
    #allocation4 [shape = 'u8[57344]{0}', space=vmem, size = 0xe000, scoped, tag = 'input window, operand 1, single buffered']
    #allocation5 [shape = 's32[1]{0}', space=sflag, size = 0x4, scoped, tag = 'scoped memory for tpu_custom_call.1']
    %7 = vsyncpa [#allocation3], 0
    %8 = vsyncpa [#allocation5], 0
    // Predicated region
    $region2: #{tpu_custom_call.1} parent=1 // pred_check
      _
    $region3: #{tpu_custom_call.1} parent=1 // pred_check_branch
      %10 = sbr.rel (0) target = $region5
    $region4: #{tpu_custom_call.1} parent=1 // pred_region
      %12 = vsyncadd [#allocation3], 0
      %s14 = sshll.u32 %s0, 4
      %s15 = int_to_ptr.hbm [resolvable:$true] %s14
      %s16 = sshll.u32 [#allocation2], 4
      %s17 = int_to_ptr.vmem [resolvable:$true] %s16
      %19 = dma.hbm_to_vmem [thread:$0]  %s15, 256, %s17, [#allocation3]
    $region5: #{tpu_custom_call.1} parent=1 // pred_fallthru
      _
    // Predicated region
    $region6: #{tpu_custom_call.1} parent=1 // pred_check
      _
    $region7: #{tpu_custom_call.1} parent=1 // pred_check_branch
      %21 = sbr.rel (0) target = $region9
    $region8: #{tpu_custom_call.1} parent=1 // pred_region
      %23 = vsyncadd [#allocation5], 0
      %s24 = sshll.u32 %s1, 4
      %s25 = int_to_ptr.hbm [resolvable:$true] %s24
      %s26 = sshll.u32 [#allocation4], 4
      %s27 = int_to_ptr.vmem [resolvable:$true] %s26
      %32 = dma.hbm_to_vmem [thread:$0]  %s25, 1792, %s27, [#allocation5], 128, 128, 8
    $region9: #{tpu_custom_call.1} parent=1 // pred_fallthru
      _
    // Predicated region
    $region10: #{tpu_custom_call.1} parent=1 // pred_check
      _
    $region11: #{tpu_custom_call.1} parent=1 // pred_check_branch
      %34 = sbr.rel (0) target = $region13
    $region12: #{tpu_custom_call.1} parent=1 // pred_region
      %36 = dma.done [#allocation3], 256
    $region13: #{tpu_custom_call.1} parent=1 // pred_fallthru
      _
    // Predicated region
    $region14: #{tpu_custom_call.1} parent=1 // pred_check
      _
    $region15: #{tpu_custom_call.1} parent=1 // pred_check_branch
      %38 = sbr.rel (0) target = $region17
    $region16: #{tpu_custom_call.1} parent=1 // pred_region
      %40 = dma.done [#allocation5], 1792
    $region17: #{tpu_custom_call.1} parent=1 // pred_fallthru
      _
    %v41 = vld [vmem:[#allocation4 + $0x68] sm:$0xff]
    %v42 = vld [vmem:[#allocation4] sm:$0xff]
    %v43 = vld [vmem:[#allocation2] sm:$0xf]
    %45 = vst [vmem:[#allocation1] ss:$4 sm:$0xff] %v43
    %v46 = vld.sshfl [vmem:[#allocation1] sm:$0xff pattern:$0x73625140]
    %v47 = vld.sshfl [vmem:[#allocation1 + $0x8] sm:$0xff pattern:$0x73625140]
    %vm50 = vcmask 1041408
    %v51 = vsel %vm50, %v46, 0.0
    %v52 = vsel %vm50, %v47, 0.0
    %v53 = vadd.f32 %v51, %v52
    %54 = vadd.xlane.f32.xlu0 %v53
    %v55 = vpop.xlane.xlu0 %54
    %v56 = vperm.slane %v42, 0
    %v57 = vmul.f32 %v55, %v56
    %v58 = vadd.f32 %v57, 0.0
    %v59 = vld [vmem:[#allocation2 + $0x4] sm:$0xf]
    %61 = vst [vmem:[#allocation1] ss:$4 sm:$0xff] %v59
    %v62 = vld.sshfl [vmem:[#allocation1] sm:$0xff pattern:$0x73625140]
    %v63 = vld.sshfl [vmem:[#allocation1 + $0x8] sm:$0xff pattern:$0x73625140]
    %v66 = vsel %vm50, %v62, 0.0
    %v67 = vsel %vm50, %v63, 0.0
    %v68 = vadd.f32 %v66, %v67
    %69 = vadd.xlane.f32.xlu0 %v68
    %v70 = vpop.xlane.xlu0 %69
    %v71 = vperm.slane %v42, 1
    %v72 = vmul.f32 %v70, %v71
    %v73 = vadd.f32 %v58, %v72
    %v74 = vld [vmem:[#allocation2 + $0x8] sm:$0xf]
    %76 = vst [vmem:[#allocation1] ss:$4 sm:$0xff] %v74
    %v77 = vld.sshfl [vmem:[#allocation1] sm:$0xff pattern:$0x73625140]
    %v78 = vld.sshfl [vmem:[#allocation1 + $0x8] sm:$0xff pattern:$0x73625140]
    %v81 = vsel %vm50, %v77, 0.0
    %v82 = vsel %vm50, %v78, 0.0
    %v83 = vadd.f32 %v81, %v82
    %84 = vadd.xlane.f32.xlu0 %v83
    %v85 = vpop.xlane.xlu0 %84
    %v86 = vperm.slane %v42, 2
    %v87 = vmul.f32 %v85, %v86
    %v88 = vadd.f32 %v73, %v87
    %v89 = vld [vmem:[#allocation2 + $0xc] sm:$0xf]
    %91 = vst [vmem:[#allocation1] ss:$4 sm:$0xff] %v89
    %v92 = vld.sshfl [vmem:[#allocation1] sm:$0xff pattern:$0x73625140]
    %v93 = vld.sshfl [vmem:[#allocation1 + $0x8] sm:$0xff pattern:$0x73625140]
    %v96 = vsel %vm50, %v92, 0.0
    %v97 = vsel %vm50, %v93, 0.0
    %v98 = vadd.f32 %v96, %v97
    %99 = vadd.xlane.f32.xlu0 %v98
    %v100 = vpop.xlane.xlu0 %99
    %v101 = vperm.slane %v42, 3
    %v102 = vmul.f32 %v100, %v101
    %v103 = vadd.f32 %v88, %v102
    %v104 = vmul.f32 %v103, 0.00390625
    %v105 = vperm.slane %v41, 0
    %v106 = vadd.f32 %v104, %v105
    %v107 = vxor.u32 %v106, 2147483648
    %v108 = vmul.f32 %v107, 1.442695
    %v109 = vpow.pop %v108
    %v110 = vadd.f32 %v109, 1.0
    %v111 = vrcp.pop %v110
    %v112 = vmul.f32 %v110, %v111
    %v113 = vsub.f32 1.0, %v112
    %v114 = vmul.f32 %v111, %v113
    %v115 = vadd.f32 %v111, %v114
    %vm116 = vweird.f32 %v110
    %vm117 = vweird.f32 %v111
    %vm118 = vmor %vm116, %vm117
    %v119 = vsel %vm118, %v111, %v115
    %v120 = vand.u32 2147483647, %v110
    %vm121 = vcmp.eq.f32.partialorder %v120, 8.507059e+37
    %v122 = vand.u32 %v110, 2147483648
    %v123 = vor.u32 1.1754944e-38, %v122
    %v124 = vsel %vm121, %v123, %v119
    %v125 = vmul.f32 1.0, %v124
    %v126 = vtanh.pop %v106
    %128 = vrot.lane.b32.xlu0 %v126, 64
    %v129 = vpop.permute.xlu0 %128
    %v131 = vmul.f32 %v125, %v129
    %v132 = vtanh.pop %v131
    %134 = vrot.lane.b32.xlu0 %v132, 96
    %v135 = vpop.permute.xlu0 %134
    %v137 = vmul.f32 %v125, %v135
    %v138 = vld [vmem:[#allocation4 + $0x8] sm:$0xff]
    %v139 = vld [vmem:[#allocation4 + $0x10] sm:$0xff]
    %v140 = vld [vmem:[#allocation4 + $0x18] sm:$0xff]
    %v141 = vld [vmem:[#allocation4 + $0x20] sm:$0xff]
    %v142 = vperm.slane %v41, 1
    %144 = vrot.lane.b32.xlu0 %v137, 32
    %v145 = vpop.permute.xlu0 %144
    %vm146 = vcmask 261120
    %v147 = vsel %vm146, %v145, 0
    %149 = vmatpush.msra.mxu0 0.0
    %150 = vmatpush.msra.mxu0 0.0
    %151 = vmatpush.msra.mxu0 0.0
    %152 = vmatpush.msra.mxu0 0.0
    %153 = vmatpush.msra.mxu0 0.0
    %154 = vmatpush.msra.mxu0 0.0
    %155 = vmatpush.msra.mxu0 0.0
    %156 = vmatpush.msra.mxu0 0.0
    %157 = vmatpush.msra.mxu0 0.0
    %158 = vmatpush.msra.mxu0 0.0
    %159 = vmatpush.msra.mxu0 0.0
    %160 = vmatpush.msra.mxu0 0.0
    %161 = vmatpush.msra.mxu0 %v141
    %162 = vmatpush.msra.mxu0 %v140
    %163 = vmatpush.msra.mxu0 %v139
    %164 = vmatpush.msra.mxu0 %v138
    %165 = vmatmul.f32.gmra.mxu0 %v147
    %v166 = vpop.f32.mrf.mxu0
    %v167 = vadd.f32 %v142, %v166
    %168 = vdwg.mxu0
    %v169 = vxor.u32 %v167, 2147483648
    %v170 = vmul.f32 %v169, 1.442695
    %v171 = vpow.pop %v170
    %v172 = vadd.f32 %v171, 1.0
    %v173 = vrcp.pop %v172
    %v174 = vmul.f32 %v172, %v173
    %v175 = vsub.f32 1.0, %v174
    %v176 = vmul.f32 %v173, %v175
    %v177 = vadd.f32 %v173, %v176
    %vm178 = vweird.f32 %v172
    %vm179 = vweird.f32 %v173
    %vm180 = vmor %vm178, %vm179
    %v181 = vsel %vm180, %v173, %v177
    %v182 = vand.u32 2147483647, %v172
    %vm183 = vcmp.eq.f32.partialorder %v182, 8.507059e+37
    %v184 = vand.u32 %v172, 2147483648
    %v185 = vor.u32 1.1754944e-38, %v184
    %v186 = vsel %vm183, %v185, %v181
    %v187 = vmul.f32 1.0, %v186
    %v188 = vtanh.pop %v167
    %190 = vrot.lane.b32.xlu0 %v188, 64
    %v191 = vpop.permute.xlu0 %190
    %v193 = vmul.f32 %v187, %v191
    %v194 = vtanh.pop %v193
    %196 = vrot.lane.b32.xlu0 %v194, 96
    %v197 = vpop.permute.xlu0 %196
    %v199 = vmul.f32 %v187, %v197
    %v200 = vld [vmem:[#allocation4 + $0x28] sm:$0xff]
    %v201 = vld [vmem:[#allocation4 + $0x30] sm:$0xff]
    %v202 = vld [vmem:[#allocation4 + $0x38] sm:$0xff]
    %v203 = vld [vmem:[#allocation4 + $0x40] sm:$0xff]
    %v204 = vperm.slane %v41, 2
    %206 = vrot.lane.b32.xlu0 %v199, 32
    %v207 = vpop.permute.xlu0 %206
    %v208 = vsel %vm146, %v207, 0
    %210 = vmatpush.msra.mxu0 0.0
    %211 = vmatpush.msra.mxu0 0.0
    %212 = vmatpush.msra.mxu0 0.0
    %213 = vmatpush.msra.mxu0 0.0
    %214 = vmatpush.msra.mxu0 0.0
    %215 = vmatpush.msra.mxu0 0.0
    %216 = vmatpush.msra.mxu0 0.0
    %217 = vmatpush.msra.mxu0 0.0
    %218 = vmatpush.msra.mxu0 0.0
    %219 = vmatpush.msra.mxu0 0.0
    %220 = vmatpush.msra.mxu0 0.0
    %221 = vmatpush.msra.mxu0 0.0
    %222 = vmatpush.msra.mxu0 %v203
    %223 = vmatpush.msra.mxu0 %v202
    %224 = vmatpush.msra.mxu0 %v201
    %225 = vmatpush.msra.mxu0 %v200
    %226 = vmatmul.f32.gmra.mxu0 %v208
    %v227 = vpop.f32.mrf.mxu0
    %v228 = vadd.f32 %v204, %v227
    %229 = vdwg.mxu0
    %v230 = vxor.u32 %v228, 2147483648
    %v231 = vmul.f32 %v230, 1.442695
    %v232 = vpow.pop %v231
    %v233 = vadd.f32 %v232, 1.0
    %v234 = vrcp.pop %v233
    %v235 = vmul.f32 %v233, %v234
    %v236 = vsub.f32 1.0, %v235
    %v237 = vmul.f32 %v234, %v236
    %v238 = vadd.f32 %v234, %v237
    %vm239 = vweird.f32 %v233
    %vm240 = vweird.f32 %v234
    %vm241 = vmor %vm239, %vm240
    %v242 = vsel %vm241, %v234, %v238
    %v243 = vand.u32 2147483647, %v233
    %vm244 = vcmp.eq.f32.partialorder %v243, 8.507059e+37
    %v245 = vand.u32 %v233, 2147483648
    %v246 = vor.u32 1.1754944e-38, %v245
    %v247 = vsel %vm244, %v246, %v242
    %v248 = vmul.f32 1.0, %v247
    %v249 = vtanh.pop %v228
    %251 = vrot.lane.b32.xlu0 %v249, 96
    %v252 = vpop.permute.xlu0 %251
    %v254 = vmul.f32 %v248, %v252
    %v255 = vtanh.pop %v254
    %257 = vrot.lane.b32.xlu0 %v255, 48
    %v258 = vpop.permute.xlu0 %257
    %v260 = vmul.f32 %v248, %v258
    %v261 = vld [vmem:[#allocation4 + $0x48] sm:$0xff]
    %v262 = vld [vmem:[#allocation4 + $0x50] sm:$0xff]
    %v263 = vperm.slane %v41, 3
    %265 = vrot.lane.b32.xlu0 %v260, 80
    %v266 = vpop.permute.xlu0 %265
    %vm267 = vcmask 130048
    %v268 = vsel %vm267, %v266, 0
    %270 = vmatpush.msra.mxu0 0.0
    %271 = vmatpush.msra.mxu0 0.0
    %272 = vmatpush.msra.mxu0 0.0
    %273 = vmatpush.msra.mxu0 0.0
    %274 = vmatpush.msra.mxu0 0.0
    %275 = vmatpush.msra.mxu0 0.0
    %276 = vmatpush.msra.mxu0 0.0
    %277 = vmatpush.msra.mxu0 0.0
    %278 = vmatpush.msra.mxu0 0.0
    %279 = vmatpush.msra.mxu0 0.0
    %280 = vmatpush.msra.mxu0 0.0
    %281 = vmatpush.msra.mxu0 0.0
    %282 = vmatpush.msra.mxu0 0.0
    %283 = vmatpush.msra.mxu0 0.0
    %284 = vmatpush.msra.mxu0 %v262
    %285 = vmatpush.msra.mxu0 %v261
    %286 = vmatmul.f32.gmra.mxu0 %v268
    %v287 = vpop.f32.mrf.mxu0
    %v288 = vadd.f32 %v263, %v287
    %289 = vdwg.mxu0
    %v290 = vxor.u32 %v288, 2147483648
    %v291 = vmul.f32 %v290, 1.442695
    %v292 = vpow.pop %v291
    %v293 = vadd.f32 %v292, 1.0
    %v294 = vrcp.pop %v293
    %v295 = vmul.f32 %v293, %v294
    %v296 = vsub.f32 1.0, %v295
    %v297 = vmul.f32 %v294, %v296
    %v298 = vadd.f32 %v294, %v297
    %vm299 = vweird.f32 %v293
    %vm300 = vweird.f32 %v294
    %vm301 = vmor %vm299, %vm300
    %v302 = vsel %vm301, %v294, %v298
    %v303 = vand.u32 2147483647, %v293
    %vm304 = vcmp.eq.f32.partialorder %v303, 8.507059e+37
    %v305 = vand.u32 %v293, 2147483648
    %v306 = vor.u32 1.1754944e-38, %v305
    %v307 = vsel %vm304, %v306, %v302
    %v308 = vmul.f32 1.0, %v307
    %v309 = vtanh.pop %v288
    %311 = vrot.lane.b32.xlu0 %v309, 96
    %v312 = vpop.permute.xlu0 %311
    %v314 = vmul.f32 %v308, %v312
    %v315 = vtanh.pop %v314
    %317 = vrot.lane.b32.xlu0 %v315, 48
    %v318 = vpop.permute.xlu0 %317
    %v320 = vmul.f32 %v308, %v318
    %v321 = vld [vmem:[#allocation4 + $0x58] sm:$0xff]
    %v322 = vld [vmem:[#allocation4 + $0x60] sm:$0xff]
    %v323 = vperm.slane %v41, 4
    %325 = vrot.lane.b32.xlu0 %v320, 80
    %v326 = vpop.permute.xlu0 %325
    %v327 = vsel %vm267, %v326, 0
    %329 = vmatpush.msra.mxu0 0.0
    %330 = vmatpush.msra.mxu0 0.0
    %331 = vmatpush.msra.mxu0 0.0
    %332 = vmatpush.msra.mxu0 0.0
    %333 = vmatpush.msra.mxu0 0.0
    %334 = vmatpush.msra.mxu0 0.0
    %335 = vmatpush.msra.mxu0 0.0
    %336 = vmatpush.msra.mxu0 0.0
    %337 = vmatpush.msra.mxu0 0.0
    %338 = vmatpush.msra.mxu0 0.0
    %339 = vmatpush.msra.mxu0 0.0
    %340 = vmatpush.msra.mxu0 0.0
    %341 = vmatpush.msra.mxu0 0.0
    %342 = vmatpush.msra.mxu0 0.0
    %343 = vmatpush.msra.mxu0 %v322
    %344 = vmatpush.msra.mxu0 %v321
    %345 = vmatmul.f32.gmra.mxu0 %v327
    %v346 = vpop.f32.mrf.mxu0
    %v347 = vadd.f32 %v323, %v346
    %348 = vdwg.mxu0
    %vm349 = vcmask 1024
    %350 = vst.msk [vmem:[%s2] sm:$0x3] %vm349, %v347
    // Predicated region
    $region18: #{tpu_custom_call.1} parent=1 // pred_check
      _
    $region19: #{tpu_custom_call.1} parent=1 // pred_check_branch
      %352 = sbr.rel (0) target = $region21
    $region20: #{tpu_custom_call.1} parent=1 // pred_region
      _
    $region21: #{tpu_custom_call.1} parent=1 // pred_fallthru
      _
    // Predicated region
    $region22: #{tpu_custom_call.1} parent=1 // pred_check
      _
    $region23: #{tpu_custom_call.1} parent=1 // pred_check_branch
      %354 = sbr.rel (0) target = $region25
    $region24: #{tpu_custom_call.1} parent=1 // pred_region
      _
    $region25: #{tpu_custom_call.1} parent=1 // pred_fallthru
      _
    %355 = vsyncpa [#allocation3], 1
    %356 = vsyncpa [#allocation5], 1

</llo_original>
